<compile_context>
chip_gen: v5e
topology: v5e:2x2
jax: 0.10.0
libtpu: 0.0.40
codegen_flags: <defaults>
</compile_context>

<pallas_src>
import jax
import jax.numpy as jnp
from jax.experimental import pallas as pl
from jax.experimental.pallas import tpu as pltpu

_LANES = 128          # vreg lane width
_BLOCK_ROWS = 2048    # 2048 * 128 * 4 B = 1 MiB per plane per tile (v5e/v7x safe)
_MIN_GRID_STEPS = 8   # enough steps to feed both v7x TensorCores / amortize startup


def _zrelu_kernel(x_ref, o_ref):
    # x_ref / o_ref: (2, block_rows, 128); plane 0 = real, plane 1 = imag.
    re = x_ref[0]
    im = x_ref[1]
    # Multiply by the 0/1 mask (NOT jnp.where) to exactly match PyTorch `x * mask`
    # semantics, including NaN/Inf propagation in masked-out positions.
    mask = jnp.logical_and(re > 0, im > 0).astype(re.dtype)
    o_ref[0] = re * mask
    o_ref[1] = im * mask


def _choose_block_rows(rows):
    """rows is a multiple of 8.  Pick a tile height that (a) caps per-tile VMEM at
    ~1 MiB/plane and (b) yields enough grid steps to shard across v7x megacore."""
    n_sublane_blocks = rows // 8
    target_steps = max(min(_MIN_GRID_STEPS, n_sublane_blocks),
                       pl.cdiv(rows, _BLOCK_ROWS))
    block_rows = ((pl.cdiv(rows, target_steps) + 7) // 8) * 8  # full-vreg rows
    return min(block_rows, rows)


def _zrelu_planes(planes):
    """planes: (2, rows, 128) real array (rows % 8 == 0). Returns masked planes."""
    _, rows, _ = planes.shape
    block_rows = _choose_block_rows(rows)
    grid = (pl.cdiv(rows, block_rows),)

    spec = pl.BlockSpec((2, block_rows, _LANES), lambda i: (0, i, 0))

    tile_bytes = 2 * block_rows * _LANES * planes.dtype.itemsize
    # 1 input + 1 output, double buffered, plus headroom for Mosaic internal scratch.
    vmem_limit = 2 * 2 * tile_bytes + (4 << 20)

    return pl.pallas_call(
        _zrelu_kernel,
        out_shape=jax.ShapeDtypeStruct(planes.shape, planes.dtype),
        grid=grid,
        in_specs=[spec],
        out_specs=spec,
        compiler_params=pltpu.CompilerParams(
            dimension_semantics=("parallel",),
            vmem_limit_bytes=int(vmem_limit)),
    )(planes)


def zrelu_planar(re, im):
    """Preferred interface: planar real/imag in, planar real/imag out.

    Avoids the complex<->planar split/repack HBM passes entirely; use this when the
    surrounding model can keep activations in planar form.
    """
    shape = re.shape
    total = re.size

    # Pad flat length to a multiple of 8*128 so every row-block is (8,128)-aligned
    # (full-vreg, unmasked stores).  The stack/pad/reshape fuse into one XLA fusion.
    chunk = 8 * _LANES
    padded = pl.cdiv(total, chunk) * chunk
    pad = padded - total

    planes = jnp.stack([re.reshape(-1), im.reshape(-1)])          # (2, total)
    if pad:
        planes = jnp.pad(planes, ((0, 0), (0, pad)))
    planes = planes.reshape(2, padded // _LANES, _LANES)

    out = _zrelu_planes(planes)
    out = out.reshape(2, -1)[:, :total]
    return out[0].reshape(shape), out[1].reshape(shape)


def _zrelu_complex(x):
    """Module-compatible wrapper: complex in, complex out (NCHW or any shape)."""
    # TODO(synk): the complex64 <-> planar split/repack cannot be fused into the
    # kernel (no complex dtype in Mosaic); it costs extra HBM passes.  Prefer
    # zrelu_planar when the caller can hold planar activations.
    re_out, im_out = zrelu_planar(jnp.real(x), jnp.imag(x))
    return jax.lax.complex(re_out, im_out).astype(x.dtype)


zrelu = jax.jit(_zrelu_complex)
zrelu_planar_jit = jax.jit(zrelu_planar)


def _reference(x):
    mask = jnp.logical_and(jnp.real(x) > 0, jnp.imag(x) > 0)
    return x * mask.astype(x.dtype)


if __name__ == "__main__":
    key = jax.random.PRNGKey(0)
    k_re, k_im, k_re2, k_im2 = jax.random.split(key, 4)

    # Primary test: NCHW shape implied by the module (batch=2, channels=4, 16x16).
    N, C, H, W = 2, 4, 16, 16
    re = jax.random.normal(k_re, (N, C, H, W), dtype=jnp.float32)
    im = jax.random.normal(k_im, (N, C, H, W), dtype=jnp.float32)
    x = jax.lax.complex(re, im)

    out = jax.block_until_ready(zrelu(x))
    ref = _reference(x)
    assert out.shape == x.shape and out.dtype == x.dtype
    assert jnp.allclose(out, ref), "mismatch vs reference (complex path)"

    # Planar (preferred) interface must agree with the complex path.
    pre, pim = jax.block_until_ready(zrelu_planar_jit(re, im))
    assert jnp.allclose(pre, jnp.real(ref)) and jnp.allclose(pim, jnp.imag(ref)), \
        "mismatch vs reference (planar path)"

    # Secondary test: element count not a multiple of 128 -> exercises padding path.
    re2 = jax.random.normal(k_re2, (2, 3, 5, 7), dtype=jnp.float32)
    im2 = jax.random.normal(k_im2, (2, 3, 5, 7), dtype=jnp.float32)
    x2 = jax.lax.complex(re2, im2)
    out2 = jax.block_until_ready(zrelu(x2))
    assert out2.shape == x2.shape and out2.dtype == x2.dtype
    assert jnp.allclose(out2, _reference(x2)), "mismatch vs reference (padded shape)"

    print("KERNEL_OK")
</pallas_src>

<mosaic_0001>
module attributes {stable_mosaic.version = 11 : i64} {
  func.func @_zrelu_kernel(%arg0: i32, %arg1: memref<2x8x128xf32, #tpu.memory_space<vmem>>, %arg2: memref<2x8x128xf32, #tpu.memory_space<vmem>>) attributes {dimension_semantics = [#tpu.dimension_semantics<parallel>], iteration_bounds = array<i64: 2>, scalar_prefetch = 0 : i64, scratch_operands = 0 : i64, tpu.core_type = #tpu.core_type<tc>, window_params = [{transform_indices = @transform_0, window_bounds = array<i64: 2, 8, 128>}, {transform_indices = @transform_1, window_bounds = array<i64: 2, 8, 128>}]} {
    %c0 = arith.constant 0 : index
    %c0_0 = arith.constant 0 : index
    %c0_1 = arith.constant 0 : index
    %0 = vector.load %arg1[%c0, %c0_0, %c0_1] : memref<2x8x128xf32, #tpu.memory_space<vmem>>, vector<1x8x128xf32>
    %1 = vector.shape_cast %0 : vector<1x8x128xf32> to vector<8x128xf32>
    %c1 = arith.constant 1 : index
    %c0_2 = arith.constant 0 : index
    %c0_3 = arith.constant 0 : index
    %2 = vector.load %arg1[%c1, %c0_2, %c0_3] : memref<2x8x128xf32, #tpu.memory_space<vmem>>, vector<1x8x128xf32>
    %3 = vector.shape_cast %2 : vector<1x8x128xf32> to vector<8x128xf32>
    %cst = arith.constant 0.000000e+00 : f32
    %4 = vector.broadcast %cst : f32 to vector<8x128xf32>
    %5 = arith.cmpf ogt, %1, %4 : vector<8x128xf32>
    %cst_4 = arith.constant 0.000000e+00 : f32
    %6 = vector.broadcast %cst_4 : f32 to vector<8x128xf32>
    %7 = arith.cmpf ogt, %3, %6 : vector<8x128xf32>
    %8 = arith.andi %5, %7 : vector<8x128xi1>
    %9 = arith.extui %8 : vector<8x128xi1> to vector<8x128xi32>
    %10 = arith.sitofp %9 : vector<8x128xi32> to vector<8x128xf32>
    %11 = arith.mulf %1, %10 : vector<8x128xf32>
    %c0_5 = arith.constant 0 : index
    %c0_6 = arith.constant 0 : index
    %c0_7 = arith.constant 0 : index
    %12 = vector.load %arg2[%c0_5, %c0_6, %c0_7] : memref<2x8x128xf32, #tpu.memory_space<vmem>>, vector<1x8x128xf32>
    %13 = vector.shape_cast %12 : vector<1x8x128xf32> to vector<8x128xf32>
    %14 = vector.shape_cast %11 : vector<8x128xf32> to vector<1x8x128xf32>
    tpu.vector_store %arg2[%c0_5, %c0_6, %c0_7], %14 {strides = array<i32>} : memref<2x8x128xf32, #tpu.memory_space<vmem>>, vector<1x8x128xf32>,
    %15 = arith.mulf %3, %10 : vector<8x128xf32>
    %c1_8 = arith.constant 1 : index
    %c0_9 = arith.constant 0 : index
    %c0_10 = arith.constant 0 : index
    %16 = vector.load %arg2[%c1_8, %c0_9, %c0_10] : memref<2x8x128xf32, #tpu.memory_space<vmem>>, vector<1x8x128xf32>
    %17 = vector.shape_cast %16 : vector<1x8x128xf32> to vector<8x128xf32>
    %18 = vector.shape_cast %15 : vector<8x128xf32> to vector<1x8x128xf32>
    tpu.vector_store %arg2[%c1_8, %c0_9, %c0_10], %18 {strides = array<i32>} : memref<2x8x128xf32, #tpu.memory_space<vmem>>, vector<1x8x128xf32>,
    return
  }
  func.func @transform_0(%arg0: i32) -> (i32, i32, i32) {
    %c0_i32 = arith.constant 0 : i32
    %c0_i32_0 = arith.constant 0 : i32
    %c0_i32_1 = arith.constant 0 : i32
    return %c0_i32, %arg0, %c0_i32_0 : i32, i32, i32
  }
  func.func @transform_1(%arg0: i32) -> (i32, i32, i32) {
    %c0_i32 = arith.constant 0 : i32
    %c0_i32_0 = arith.constant 0 : i32
    %c0_i32_1 = arith.constant 0 : i32
    return %c0_i32, %arg0, %c0_i32_0 : i32, i32, i32
  }
}

</mosaic_0001>

<llo_original>
// kernel: custom-call.1
$region0: #{custom-call.1}
  %s0 = inlined_call_operand.hbm [shape: c64[2,4,16,16], index: 0, kind: input, shape index: {}]
  %s1 = inlined_call_operand.vmem [shape: f32[2,4,16,16], index: 1, kind: output, shape index: {}]
  %s2 = scalar_lea.hbm %s0, 128
  $region1: #{custom-call.1} parent=0
    #allocation0 [shape = 's32[1]{0}', space=sflag, size = 0x4, scoped, tag = 'scoped memory for custom-call.1']
    %3 = vsyncpa [#allocation0], 0
    %s5 = sshll.u32 %s2, 4
    %s6 = int_to_ptr.hbm [resolvable:$true] %s5
    %s7 = sshll.u32 %s1, 4
    %s8 = int_to_ptr.vmem [resolvable:$true] %s7
    %10 = dma.hbm_to_vmem [thread:$0]  %s6, 2048, %s8, [#allocation0]
    %12 = dma.done [#allocation0], 2048
    %13 = vsyncpa [#allocation0], 1

// kernel: custom-call
$region0: #{custom-call}
  %s0 = inlined_call_operand.hbm [shape: c64[2,4,16,16], index: 0, kind: input, shape index: {}]
  %s1 = inlined_call_operand.vmem [shape: f32[2,4,16,16], index: 1, kind: output, shape index: {}]
  $region1: #{custom-call} parent=0
    #allocation0 [shape = 's32[1]{0}', space=sflag, size = 0x4, scoped, tag = 'scoped memory for custom-call']
    %2 = vsyncpa [#allocation0], 0
    %s4 = sshll.u32 %s0, 4
    %s5 = int_to_ptr.hbm [resolvable:$true] %s4
    %s6 = sshll.u32 %s1, 4
    %s7 = int_to_ptr.vmem [resolvable:$true] %s6
    %9 = dma.hbm_to_vmem [thread:$0]  %s5, 2048, %s7, [#allocation0]
    %11 = dma.done [#allocation0], 2048
    %12 = vsyncpa [#allocation0], 1

// kernel: squeeze.3
$region0: #{squeeze.3}
  %s0 = inlined_call_operand.vmem [shape: f32[2048], index: 0, kind: input, shape index: {}]
  %s1 = inlined_call_operand.vmem [shape: f32[2,4,16,16], index: 1, kind: output, shape index: {}]
  %v2 = vld [vmem:[%s0] sm:$0xff]
  %vm3 = vcmask 130048
  %4 = vst.msk [vmem:[%s1] ss:$8 sm:$0xf] %vm3, %v2
  %5 = vst.msk [vmem:[%s1] ss:$8 sm:$0xf0] %vm3, %v2
  %s6 = scalar_lea.vmem %s0, 8
  %v7 = vld [vmem:[%s6] sm:$0xff]
  %vm8 = vcmask 130048
  %s9 = scalar_lea.vmem %s1, 64
  %10 = vst.msk [vmem:[%s9] ss:$8 sm:$0xf] %vm8, %v7
  %s11 = scalar_lea.vmem %s1, 64
  %12 = vst.msk [vmem:[%s11] ss:$8 sm:$0xf0] %vm8, %v7
  %v13 = vld [vmem:[%s0] sm:$0xff]
  %14 = vrot.lane.b32.xlu0 %v13, 112
  %v15 = vpop.permute.xlu0 %14
  %vm16 = vcmask 130048
  %s17 = scalar_lea.vmem %s1, 1
  %18 = vst.msk [vmem:[%s17] ss:$8 sm:$0xf] %vm16, %v15
  %s19 = scalar_lea.vmem %s1, 1
  %20 = vst.msk [vmem:[%s19] ss:$8 sm:$0xf0] %vm16, %v15
  %s21 = scalar_lea.vmem %s0, 8
  %v22 = vld [vmem:[%s21] sm:$0xff]
  %23 = vrot.lane.b32.xlu0 %v22, 112
  %v24 = vpop.permute.xlu0 %23
  %vm25 = vcmask 130048
  %s26 = scalar_lea.vmem %s1, 65
  %27 = vst.msk [vmem:[%s26] ss:$8 sm:$0xf] %vm25, %v24
  %s28 = scalar_lea.vmem %s1, 65
  %29 = vst.msk [vmem:[%s28] ss:$8 sm:$0xf0] %vm25, %v24
  %v30 = vld [vmem:[%s0] sm:$0xff]
  %31 = vrot.lane.b32.xlu0 %v30, 96
  %v32 = vpop.permute.xlu0 %31
  %vm33 = vcmask 130048
  %s34 = scalar_lea.vmem %s1, 2
  %35 = vst.msk [vmem:[%s34] ss:$8 sm:$0xf] %vm33, %v32
  %s36 = scalar_lea.vmem %s1, 2
  %37 = vst.msk [vmem:[%s36] ss:$8 sm:$0xf0] %vm33, %v32
  %s38 = scalar_lea.vmem %s0, 8
  %v39 = vld [vmem:[%s38] sm:$0xff]
  %40 = vrot.lane.b32.xlu0 %v39, 96
  %v41 = vpop.permute.xlu0 %40
  %vm42 = vcmask 130048
  %s43 = scalar_lea.vmem %s1, 66
  %44 = vst.msk [vmem:[%s43] ss:$8 sm:$0xf] %vm42, %v41
  %s45 = scalar_lea.vmem %s1, 66
  %46 = vst.msk [vmem:[%s45] ss:$8 sm:$0xf0] %vm42, %v41
  %v47 = vld [vmem:[%s0] sm:$0xff]
  %48 = vrot.lane.b32.xlu0 %v47, 80
  %v49 = vpop.permute.xlu0 %48
  %vm50 = vcmask 130048
  %s51 = scalar_lea.vmem %s1, 3
  %52 = vst.msk [vmem:[%s51] ss:$8 sm:$0xf] %vm50, %v49
  %s53 = scalar_lea.vmem %s1, 3
  %54 = vst.msk [vmem:[%s53] ss:$8 sm:$0xf0] %vm50, %v49
  %s55 = scalar_lea.vmem %s0, 8
  %v56 = vld [vmem:[%s55] sm:$0xff]
  %57 = vrot.lane.b32.xlu0 %v56, 80
  %v58 = vpop.permute.xlu0 %57
  %vm59 = vcmask 130048
  %s60 = scalar_lea.vmem %s1, 67
  %61 = vst.msk [vmem:[%s60] ss:$8 sm:$0xf] %vm59, %v58
  %s62 = scalar_lea.vmem %s1, 67
  %63 = vst.msk [vmem:[%s62] ss:$8 sm:$0xf0] %vm59, %v58
  %v64 = vld [vmem:[%s0] sm:$0xff]
  %65 = vrot.lane.b32.xlu0 %v64, 64
  %v66 = vpop.permute.xlu0 %65
  %vm67 = vcmask 130048
  %s68 = scalar_lea.vmem %s1, 4
  %69 = vst.msk [vmem:[%s68] ss:$8 sm:$0xf] %vm67, %v66
  %s70 = scalar_lea.vmem %s1, 4
  %71 = vst.msk [vmem:[%s70] ss:$8 sm:$0xf0] %vm67, %v66
  %s72 = scalar_lea.vmem %s0, 8
  %v73 = vld [vmem:[%s72] sm:$0xff]
  %74 = vrot.lane.b32.xlu0 %v73, 64
  %v75 = vpop.permute.xlu0 %74
  %vm76 = vcmask 130048
  %s77 = scalar_lea.vmem %s1, 68
  %78 = vst.msk [vmem:[%s77] ss:$8 sm:$0xf] %vm76, %v75
  %s79 = scalar_lea.vmem %s1, 68
  %80 = vst.msk [vmem:[%s79] ss:$8 sm:$0xf0] %vm76, %v75
  %v81 = vld [vmem:[%s0] sm:$0xff]
  %82 = vrot.lane.b32.xlu0 %v81, 48
  %v83 = vpop.permute.xlu0 %82
  %vm84 = vcmask 130048
  %s85 = scalar_lea.vmem %s1, 5
  %86 = vst.msk [vmem:[%s85] ss:$8 sm:$0xf] %vm84, %v83
  %s87 = scalar_lea.vmem %s1, 5
  %88 = vst.msk [vmem:[%s87] ss:$8 sm:$0xf0] %vm84, %v83
  %s89 = scalar_lea.vmem %s0, 8
  %v90 = vld [vmem:[%s89] sm:$0xff]
  %91 = vrot.lane.b32.xlu0 %v90, 48
  %v92 = vpop.permute.xlu0 %91
  %vm93 = vcmask 130048
  %s94 = scalar_lea.vmem %s1, 69
  %95 = vst.msk [vmem:[%s94] ss:$8 sm:$0xf] %vm93, %v92
  %s96 = scalar_lea.vmem %s1, 69
  %97 = vst.msk [vmem:[%s96] ss:$8 sm:$0xf0] %vm93, %v92
  %v98 = vld [vmem:[%s0] sm:$0xff]
  %99 = vrot.lane.b32.xlu0 %v98, 32
  %v100 = vpop.permute.xlu0 %99
  %vm101 = vcmask 130048
  %s102 = scalar_lea.vmem %s1, 6
  %103 = vst.msk [vmem:[%s102] ss:$8 sm:$0xf] %vm101, %v100
  %s104 = scalar_lea.vmem %s1, 6
  %105 = vst.msk [vmem:[%s104] ss:$8 sm:$0xf0] %vm101, %v100
  %s106 = scalar_lea.vmem %s0, 8
  %v107 = vld [vmem:[%s106] sm:$0xff]
  %108 = vrot.lane.b32.xlu0 %v107, 32
  %v109 = vpop.permute.xlu0 %108
  %vm110 = vcmask 130048
  %s111 = scalar_lea.vmem %s1, 70
  %112 = vst.msk [vmem:[%s111] ss:$8 sm:$0xf] %vm110, %v109
  %s113 = scalar_lea.vmem %s1, 70
  %114 = vst.msk [vmem:[%s113] ss:$8 sm:$0xf0] %vm110, %v109
  %v115 = vld [vmem:[%s0] sm:$0xff]
  %116 = vrot.lane.b32.xlu0 %v115, 16
  %v117 = vpop.permute.xlu0 %116
  %vm118 = vcmask 130048
  %s119 = scalar_lea.vmem %s1, 7
  %120 = vst.msk [vmem:[%s119] ss:$8 sm:$0xf] %vm118, %v117
  %s121 = scalar_lea.vmem %s1, 7
  %122 = vst.msk [vmem:[%s121] ss:$8 sm:$0xf0] %vm118, %v117
  %s123 = scalar_lea.vmem %s0, 8
  %v124 = vld [vmem:[%s123] sm:$0xff]
  %125 = vrot.lane.b32.xlu0 %v124, 16
  %v126 = vpop.permute.xlu0 %125
  %vm127 = vcmask 130048
  %s128 = scalar_lea.vmem %s1, 71
  %129 = vst.msk [vmem:[%s128] ss:$8 sm:$0xf] %vm127, %v126
  %s130 = scalar_lea.vmem %s1, 71
  %131 = vst.msk [vmem:[%s130] ss:$8 sm:$0xf0] %vm127, %v126

// kernel: squeeze.2
$region0: #{squeeze.2}
  %s0 = inlined_call_operand.vmem [shape: f32[1,16,128], index: 0, kind: input, shape index: {}]
  %s1 = inlined_call_operand.vmem [shape: f32[2,4,16,16], index: 1, kind: output, shape index: {}]
  %v2 = vld [vmem:[%s0] sm:$0xff]
  %vm3 = vcmask 130048
  %4 = vst.msk [vmem:[%s1] ss:$8 sm:$0xf] %vm3, %v2
  %5 = vst.msk [vmem:[%s1] ss:$8 sm:$0xf0] %vm3, %v2
  %s6 = scalar_lea.vmem %s0, 8
  %v7 = vld [vmem:[%s6] sm:$0xff]
  %vm8 = vcmask 130048
  %s9 = scalar_lea.vmem %s1, 64
  %10 = vst.msk [vmem:[%s9] ss:$8 sm:$0xf] %vm8, %v7
  %s11 = scalar_lea.vmem %s1, 64
  %12 = vst.msk [vmem:[%s11] ss:$8 sm:$0xf0] %vm8, %v7
  %v13 = vld [vmem:[%s0] sm:$0xff]
  %14 = vrot.lane.b32.xlu0 %v13, 112
  %v15 = vpop.permute.xlu0 %14
  %vm16 = vcmask 130048
  %s17 = scalar_lea.vmem %s1, 1
  %18 = vst.msk [vmem:[%s17] ss:$8 sm:$0xf] %vm16, %v15
  %s19 = scalar_lea.vmem %s1, 1
  %20 = vst.msk [vmem:[%s19] ss:$8 sm:$0xf0] %vm16, %v15
  %s21 = scalar_lea.vmem %s0, 8
  %v22 = vld [vmem:[%s21] sm:$0xff]
  %23 = vrot.lane.b32.xlu0 %v22, 112
  %v24 = vpop.permute.xlu0 %23
  %vm25 = vcmask 130048
  %s26 = scalar_lea.vmem %s1, 65
  %27 = vst.msk [vmem:[%s26] ss:$8 sm:$0xf] %vm25, %v24
  %s28 = scalar_lea.vmem %s1, 65
  %29 = vst.msk [vmem:[%s28] ss:$8 sm:$0xf0] %vm25, %v24
  %v30 = vld [vmem:[%s0] sm:$0xff]
  %31 = vrot.lane.b32.xlu0 %v30, 96
  %v32 = vpop.permute.xlu0 %31
  %vm33 = vcmask 130048
  %s34 = scalar_lea.vmem %s1, 2
  %35 = vst.msk [vmem:[%s34] ss:$8 sm:$0xf] %vm33, %v32
  %s36 = scalar_lea.vmem %s1, 2
  %37 = vst.msk [vmem:[%s36] ss:$8 sm:$0xf0] %vm33, %v32
  %s38 = scalar_lea.vmem %s0, 8
  %v39 = vld [vmem:[%s38] sm:$0xff]
  %40 = vrot.lane.b32.xlu0 %v39, 96
  %v41 = vpop.permute.xlu0 %40
  %vm42 = vcmask 130048
  %s43 = scalar_lea.vmem %s1, 66
  %44 = vst.msk [vmem:[%s43] ss:$8 sm:$0xf] %vm42, %v41
  %s45 = scalar_lea.vmem %s1, 66
  %46 = vst.msk [vmem:[%s45] ss:$8 sm:$0xf0] %vm42, %v41
  %v47 = vld [vmem:[%s0] sm:$0xff]
  %48 = vrot.lane.b32.xlu0 %v47, 80
  %v49 = vpop.permute.xlu0 %48
  %vm50 = vcmask 130048
  %s51 = scalar_lea.vmem %s1, 3
  %52 = vst.msk [vmem:[%s51] ss:$8 sm:$0xf] %vm50, %v49
  %s53 = scalar_lea.vmem %s1, 3
  %54 = vst.msk [vmem:[%s53] ss:$8 sm:$0xf0] %vm50, %v49
  %s55 = scalar_lea.vmem %s0, 8
  %v56 = vld [vmem:[%s55] sm:$0xff]
  %57 = vrot.lane.b32.xlu0 %v56, 80
  %v58 = vpop.permute.xlu0 %57
  %vm59 = vcmask 130048
  %s60 = scalar_lea.vmem %s1, 67
  %61 = vst.msk [vmem:[%s60] ss:$8 sm:$0xf] %vm59, %v58
  %s62 = scalar_lea.vmem %s1, 67
  %63 = vst.msk [vmem:[%s62] ss:$8 sm:$0xf0] %vm59, %v58
  %v64 = vld [vmem:[%s0] sm:$0xff]
  %65 = vrot.lane.b32.xlu0 %v64, 64
  %v66 = vpop.permute.xlu0 %65
  %vm67 = vcmask 130048
  %s68 = scalar_lea.vmem %s1, 4
  %69 = vst.msk [vmem:[%s68] ss:$8 sm:$0xf] %vm67, %v66
  %s70 = scalar_lea.vmem %s1, 4
  %71 = vst.msk [vmem:[%s70] ss:$8 sm:$0xf0] %vm67, %v66
  %s72 = scalar_lea.vmem %s0, 8
  %v73 = vld [vmem:[%s72] sm:$0xff]
  %74 = vrot.lane.b32.xlu0 %v73, 64
  %v75 = vpop.permute.xlu0 %74
  %vm76 = vcmask 130048
  %s77 = scalar_lea.vmem %s1, 68
  %78 = vst.msk [vmem:[%s77] ss:$8 sm:$0xf] %vm76, %v75
  %s79 = scalar_lea.vmem %s1, 68
  %80 = vst.msk [vmem:[%s79] ss:$8 sm:$0xf0] %vm76, %v75
  %v81 = vld [vmem:[%s0] sm:$0xff]
  %82 = vrot.lane.b32.xlu0 %v81, 48
  %v83 = vpop.permute.xlu0 %82
  %vm84 = vcmask 130048
  %s85 = scalar_lea.vmem %s1, 5
  %86 = vst.msk [vmem:[%s85] ss:$8 sm:$0xf] %vm84, %v83
  %s87 = scalar_lea.vmem %s1, 5
  %88 = vst.msk [vmem:[%s87] ss:$8 sm:$0xf0] %vm84, %v83
  %s89 = scalar_lea.vmem %s0, 8
  %v90 = vld [vmem:[%s89] sm:$0xff]
  %91 = vrot.lane.b32.xlu0 %v90, 48
  %v92 = vpop.permute.xlu0 %91
  %vm93 = vcmask 130048
  %s94 = scalar_lea.vmem %s1, 69
  %95 = vst.msk [vmem:[%s94] ss:$8 sm:$0xf] %vm93, %v92
  %s96 = scalar_lea.vmem %s1, 69
  %97 = vst.msk [vmem:[%s96] ss:$8 sm:$0xf0] %vm93, %v92
  %v98 = vld [vmem:[%s0] sm:$0xff]
  %99 = vrot.lane.b32.xlu0 %v98, 32
  %v100 = vpop.permute.xlu0 %99
  %vm101 = vcmask 130048
  %s102 = scalar_lea.vmem %s1, 6
  %103 = vst.msk [vmem:[%s102] ss:$8 sm:$0xf] %vm101, %v100
  %s104 = scalar_lea.vmem %s1, 6
  %105 = vst.msk [vmem:[%s104] ss:$8 sm:$0xf0] %vm101, %v100
  %s106 = scalar_lea.vmem %s0, 8
  %v107 = vld [vmem:[%s106] sm:$0xff]
  %108 = vrot.lane.b32.xlu0 %v107, 32
  %v109 = vpop.permute.xlu0 %108
  %vm110 = vcmask 130048
  %s111 = scalar_lea.vmem %s1, 70
  %112 = vst.msk [vmem:[%s111] ss:$8 sm:$0xf] %vm110, %v109
  %s113 = scalar_lea.vmem %s1, 70
  %114 = vst.msk [vmem:[%s113] ss:$8 sm:$0xf0] %vm110, %v109
  %v115 = vld [vmem:[%s0] sm:$0xff]
  %116 = vrot.lane.b32.xlu0 %v115, 16
  %v117 = vpop.permute.xlu0 %116
  %vm118 = vcmask 130048
  %s119 = scalar_lea.vmem %s1, 7
  %120 = vst.msk [vmem:[%s119] ss:$8 sm:$0xf] %vm118, %v117
  %s121 = scalar_lea.vmem %s1, 7
  %122 = vst.msk [vmem:[%s121] ss:$8 sm:$0xf0] %vm118, %v117
  %s123 = scalar_lea.vmem %s0, 8
  %v124 = vld [vmem:[%s123] sm:$0xff]
  %125 = vrot.lane.b32.xlu0 %v124, 16
  %v126 = vpop.permute.xlu0 %125
  %vm127 = vcmask 130048
  %s128 = scalar_lea.vmem %s1, 71
  %129 = vst.msk [vmem:[%s128] ss:$8 sm:$0xf] %vm127, %v126
  %s130 = scalar_lea.vmem %s1, 71
  %131 = vst.msk [vmem:[%s130] ss:$8 sm:$0xf0] %vm127, %v126

// kernel: custom-call.2
$region0: #{custom-call.2}
  %s0 = inlined_call_operand.vmem [shape: f32[2,4,16,16], index: 0, kind: input, shape index: {}]
  %s1 = inlined_call_operand.vmem [shape: f32[2,4,16,16], index: 1, kind: input, shape index: {}]
  %s2 = inlined_call_operand.hbm [shape: c64[2,4,16,16], index: 2, kind: output, shape index: {}]
  %s3 = scalar_lea.hbm %s2, 128
  $region1: #{custom-call.2} parent=0
    #allocation0 [shape = 's32[1]{0}', space=sflag, size = 0x4, scoped, tag = 'scoped memory for custom-call.2']
    %4 = vsyncpa [#allocation0], 0
    %s6 = sshll.u32 %s0, 4
    %s7 = int_to_ptr.vmem [resolvable:$true] %s6
    %s8 = sshll.u32 %s2, 4
    %s9 = int_to_ptr.hbm [resolvable:$true] %s8
    %11 = dma.vmem_to_hbm [thread:$0]  %s7, 2048, %s9, [#allocation0]
    %13 = dma.done [#allocation0], 2048
    %14 = vsyncpa [#allocation0], 1
  $region2: #{custom-call.2} parent=0
    #allocation1 [shape = 's32[1]{0}', space=sflag, size = 0x4, scoped, tag = 'scoped memory for custom-call.2']
    %15 = vsyncpa [#allocation1], 0
    %s17 = sshll.u32 %s1, 4
    %s18 = int_to_ptr.vmem [resolvable:$true] %s17
    %s19 = sshll.u32 %s3, 4
    %s20 = int_to_ptr.hbm [resolvable:$true] %s19
    %22 = dma.vmem_to_hbm [thread:$0]  %s18, 2048, %s20, [#allocation1]
    %24 = dma.done [#allocation1], 2048
    %25 = vsyncpa [#allocation1], 1

// kernel: _zrelu_complex.1
$region0: #{_zrelu_complex.1}
  #allocation0 [shape = 'u32[]', space=smem, size = 0x4, offset = 0x4, fixed_abs, tag = 'smem constant byte address 0x4 - core index']
  #allocation1 [shape = 'u32[72,128]{1,0:T(1,128)}', space=vmem, size = 0x9000, scoped, tag = 'internal scratch']
  %s0 = inlined_call_operand.vmem [shape: f32[2,16,128], index: 0, kind: input, shape index: {}]
  %s1 = inlined_call_operand.vmem [shape: f32[2,16,128], index: 1, kind: output, shape index: {}]
  %s2 = sld [smem:[#allocation0]]
  $region109: #{_zrelu_complex.1} parent=0
    _
  %s4 = ssub.s32 1, %s2
  %s5 = scalar_select 0, %s4, %s2
  $region1: #{_zrelu_complex.1} parent=0
    #allocation2 [shape = 'u8[16384]{0}', space=vmem, size = 0x4000, scoped, tag = 'input window, operand 0']
    #allocation3 [shape = 'u8[16384]{0}', space=vmem, size = 0x4000, scoped, tag = 'output window, operand 0']
    loop: start=0, step=1, limit=4
    $region2: #{_zrelu_complex.1} parent=1 // loop_pre_header
      _
    $region3: #{_zrelu_complex.1} parent=1 // loop_header
      %s7 = sphi 0, %s11
      %p8 = scmp.ge.s32.totalorder %s7, 4
      %s17 = sphi 0, %s19
      %s20 = sphi 0, %s17
      %s21 = sphi 0, %s20
      %s37 = sphi 0, %s21
      %s43 = sphi 0, %s45
      %s46 = sphi 0, %s43
      %s47 = sphi 0, %s46
      %s63 = sphi 0, %s47
    $region4: #{_zrelu_complex.1} parent=1 // loop_header_branch
      %10 = sbr.rel (%p8) target = $region8
    $region5: #{_zrelu_complex.1} parent=1 // loop_body
      %s12 = ssub.s32 %s7, 1
      %s13 = ssub.s32 %s7, 2
      %s14 = sadd.s32 %s7, 1
      %s15 = ssub.s32 %s7, %s14
      %p16 = scmp.eq.s32.totalorder %s15, 0
      %s18 = sadd.s32 %s17, 1
      %s19 = scalar_select %p16, %s17, %s18
      %p22 = pneg %p16
      %p23 = scmp.eq.s32.totalorder %s7, 1
      %p24 = por %p22, %p23
      %p25 = scmp.ne.s32.totalorder %s17, %s20
      %p26 = scmp.eq.s32.totalorder %s7, 0
      %p27 = por %p25, %p26
      %p28 = scmp.ne.s32.totalorder %s17, %s20
      %p29 = scmp.eq.s32.totalorder %s12, 1
      %p30 = por %p28, %p29
      %p31 = scmp.ne.s32.totalorder %s20, %s21
      %p32 = scmp.eq.s32.totalorder %s12, 0
      %p33 = por %p31, %p32
      %p34 = scmp.ne.s32.totalorder %s20, %s21
      %p35 = scmp.eq.s32.totalorder %s13, 1
      %p36 = por %p34, %p35
      %p38 = scmp.ne.s32.totalorder %s21, %s37
      %p39 = scmp.eq.s32.totalorder %s13, 0
      %p40 = por %p38, %p39
      %s41 = ssub.s32 %s7, %s14
      %p42 = scmp.eq.s32.totalorder %s41, 0
      %s44 = sadd.s32 %s43, 1
      %s45 = scalar_select %p42, %s43, %s44
      %p48 = pneg %p42
      %p49 = scmp.eq.s32.totalorder %s7, 1
      %p50 = por %p48, %p49
      %p51 = scmp.ne.s32.totalorder %s43, %s46
      %p52 = scmp.eq.s32.totalorder %s7, 0
      %p53 = por %p51, %p52
      %p54 = scmp.ne.s32.totalorder %s43, %s46
      %p55 = scmp.eq.s32.totalorder %s12, 1
      %p56 = por %p54, %p55
      %p57 = scmp.ne.s32.totalorder %s46, %s47
      %p58 = scmp.eq.s32.totalorder %s12, 0
      %p59 = por %p57, %p58
      %p60 = scmp.ne.s32.totalorder %s46, %s47
      %p61 = scmp.eq.s32.totalorder %s13, 1
      %p62 = por %p60, %p61
      %p64 = scmp.ne.s32.totalorder %s47, %s63
      %p65 = scmp.eq.s32.totalorder %s13, 0
      %p66 = por %p64, %p65
      %p67 = scmp.le.s32.totalorder 1, %s7
      %p68 = scmp.lt.s32.totalorder %s7, 3
      %p69 = pnand %p67, %p68
      %p70 = pneg %p69
      // Predicated region
      $region9: #{_zrelu_complex.1} parent=5 // pred_check
        _
      $region10: #{_zrelu_complex.1} parent=5 // pred_check_branch
        %72 = sbr.rel (%p69) target = $region12
      $region11: #{_zrelu_complex.1} parent=5 // pred_region
        %s73 = ssub.s32 %s7, 1
      $region12: #{_zrelu_complex.1} parent=5 // pred_fallthru
        _
      %p74 = scmp.lt.s32.totalorder %s7, 2
      // Predicated region
      $region13: #{_zrelu_complex.1} parent=5 // pred_check
        %p75 = pneg %p74
      $region14: #{_zrelu_complex.1} parent=5 // pred_check_branch
        %77 = sbr.rel (%p75) target = $region16
      $region15: #{_zrelu_complex.1} parent=5 // pred_region
        // Predicated region
        $region17: #{_zrelu_complex.1} parent=15 // pred_check
          %p78 = pneg %p27
        $region18: #{_zrelu_complex.1} parent=15 // pred_check_branch
          %80 = sbr.rel (%p78) target = $region20
        $region19: #{_zrelu_complex.1} parent=15 // pred_region
          %s81 = sand.u32 %s17, 1
          %s82 = sand.u32 %s17, 1
          %s83 = smul.addr %s82, 16
          %s84 = scalar_lea.vmem [#allocation2], %s83
          %s85 = smul.addr %s7, 8
          %s86 = scalar_lea.vmem %s0, %s85
          // Predicated region
          $region21: #{_zrelu_complex.1} parent=19 // pred_check
            _
          $region22: #{_zrelu_complex.1} parent=19 // pred_check_branch
            %88 = sbr.rel (0) target = $region24
          $region23: #{_zrelu_complex.1} parent=19 // pred_region
            // Predicated region
            $region25: #{_zrelu_complex.1} parent=23 // pred_check
              _
            $region26: #{_zrelu_complex.1} parent=23 // pred_check_branch
              %90 = sbr.rel (0) target = $region28
            $region27: #{_zrelu_complex.1} parent=23 // pred_region
              // Predicated region
              $region40: #{_zrelu_complex.1} parent=27 // pred_check
                _
              $region41: #{_zrelu_complex.1} parent=27 // pred_check_branch
                %108 = sbr.rel (0) target = $region43
              $region42: #{_zrelu_complex.1} parent=27 // pred_region
                loop: start=0, step=1, limit=1
                $region44: #{_zrelu_complex.1} parent=42 // loop_pre_header
                  _
                $region45: #{_zrelu_complex.1} parent=42 // loop_header
                  %s110 = sphi 0, %s114
                  %p111 = scmp.ge.s32.totalorder %s110, 1
                  %s115 = sphi %s86, %s86
                  %s116 = sphi %s84, %s84
                $region46: #{_zrelu_complex.1} parent=42 // loop_header_branch
                  %113 = sbr.rel (%p111) target = $region50
                $region47: #{_zrelu_complex.1} parent=42 // loop_body
                  %v117 = vld [vmem:[%s115] sm:$0xff]
                  %118 = vst [vmem:[%s116] sm:$0xff] %v117
                  %v119 = vld [vmem:[%s115 + $0x10] sm:$0xff]
                  %120 = vst [vmem:[%s116 + $0x8] sm:$0xff] %v119
                $region48: #{_zrelu_complex.1} parent=42 // loop_footer
                  %s114 = sadd.s32 1, %s110
                $region49: #{_zrelu_complex.1} parent=42 // loop_footer_branch
                  %109 = sbr.rel target = $region45
                $region50: #{_zrelu_complex.1} parent=42 // loop_exit
                  _
              $region43: #{_zrelu_complex.1} parent=27 // pred_fallthru
                _
              // Predicated region
              $region51: #{_zrelu_complex.1} parent=27 // pred_check
                _
              $region52: #{_zrelu_complex.1} parent=27 // pred_check_branch
                %122 = sbr.rel target = $region54
              $region53: #{_zrelu_complex.1} parent=27 // pred_region
                _
              $region54: #{_zrelu_complex.1} parent=27 // pred_fallthru
                _
            $region28: #{_zrelu_complex.1} parent=23 // pred_fallthru
              _
            // Predicated region
            $region29: #{_zrelu_complex.1} parent=23 // pred_check
              _
            $region30: #{_zrelu_complex.1} parent=23 // pred_check_branch
              %92 = sbr.rel target = $region32
            $region31: #{_zrelu_complex.1} parent=23 // pred_region
              %s94 = ssub.s32 256, 1
              loop: start=0, step=1, limit=1
              $region33: #{_zrelu_complex.1} parent=31 // loop_pre_header
                _
              $region34: #{_zrelu_complex.1} parent=31 // loop_header
                %s96 = sphi 0, %s100
                %p97 = scmp.ge.s32.totalorder %s96, 1
                %s101 = sphi %s86, %s86
                %s102 = sphi %s84, %s84
              $region35: #{_zrelu_complex.1} parent=31 // loop_header_branch
                %99 = sbr.rel (%p97) target = $region39
              $region36: #{_zrelu_complex.1} parent=31 // loop_body
                %v103 = vld [vmem:[%s101] sm:%s94]
                %104 = vst [vmem:[%s102] sm:%s94] %v103
                %v105 = vld [vmem:[%s101 + $0x10] sm:%s94]
                %106 = vst [vmem:[%s102 + $0x8] sm:%s94] %v105
              $region37: #{_zrelu_complex.1} parent=31 // loop_footer
                %s100 = sadd.s32 1, %s96
              $region38: #{_zrelu_complex.1} parent=31 // loop_footer_branch
                %95 = sbr.rel target = $region34
              $region39: #{_zrelu_complex.1} parent=31 // loop_exit
                _
            $region32: #{_zrelu_complex.1} parent=23 // pred_fallthru
              _
          $region24: #{_zrelu_complex.1} parent=19 // pred_fallthru
            _
          %123 = vnop
        $region20: #{_zrelu_complex.1} parent=15 // pred_fallthru
          _
      $region16: #{_zrelu_complex.1} parent=5 // pred_fallthru
        _
      %p124 = scmp.le.s32.totalorder 1, %s7
      %p125 = scmp.lt.s32.totalorder %s7, 3
      %p126 = pnand %p124, %p125
      %p127 = pneg %p126
      // Predicated region
      $region55: #{_zrelu_complex.1} parent=5 // pred_check
        _
      $region56: #{_zrelu_complex.1} parent=5 // pred_check_branch
        %129 = sbr.rel (%p126) target = $region58
      $region57: #{_zrelu_complex.1} parent=5 // pred_region
        %s130 = ssub.s32 %s7, 1
        %s131 = sand.u32 %s20, 1
        %s132 = sand.u32 %s20, 1
        %s133 = smul.addr %s132, 16
        %s134 = scalar_lea.vmem [#allocation2], %s133
        // Predicated region
        $region59: #{_zrelu_complex.1} parent=57 // pred_check
          %p135 = pneg %p33
        $region60: #{_zrelu_complex.1} parent=57 // pred_check_branch
          %137 = sbr.rel (%p135) target = $region62
        $region61: #{_zrelu_complex.1} parent=57 // pred_region
          _
        $region62: #{_zrelu_complex.1} parent=57 // pred_fallthru
          _
        %s138 = sand.u32 %s20, 1
        %s139 = sand.u32 %s20, 1
        %s140 = smul.addr %s139, 16
        %s141 = scalar_lea.vmem [#allocation2], %s140
        %p142 = pneg %p33
        %p143 = pneg %p30
        %p144 = pneg %p59
        %p145 = pneg %p56
        %s146 = sand.u32 %s46, 1
        %s147 = sand.u32 %s46, 1
        %s148 = smul.addr %s147, 16
        %s149 = scalar_lea.vmem [#allocation3], %s148
        %v150 = vld [vmem:[%s134] sm:$0xff]
        %s151 = scalar_lea.vmem %s134, 8 [#allocation2]
        %v152 = vld [vmem:[%s151] sm:$0xff]
        %vm153 = vcmp.gt.f32.partialorder %v150, 0.0
        %vm154 = vcmp.gt.f32.partialorder %v152, 0.0
        %vm155 = vmand %vm153, %vm154
        %v156 = vsel %vm155, 1, 0
        %v157 = vcvt.s32.f32 %v156
        %v158 = vmul.f32 %v150, %v157
        %159 = vst [vmem:[%s149] sm:$0xff] %v158
        %v160 = vmul.f32 %v152, %v157
        %s161 = scalar_lea.vmem %s149, 8 [#allocation3]
        %162 = vst [vmem:[%s161] sm:$0xff] %v160
        %s163 = sand.u32 %s46, 1
        %s164 = sand.u32 %s46, 1
        %s165 = smul.addr %s164, 16
        %s166 = scalar_lea.vmem [#allocation3], %s165
        // Predicated region
        $region63: #{_zrelu_complex.1} parent=57 // pred_check
          %p167 = pneg %p56
        $region64: #{_zrelu_complex.1} parent=57 // pred_check_branch
          %169 = sbr.rel (%p167) target = $region66
        $region65: #{_zrelu_complex.1} parent=57 // pred_region
          %s170 = smul.addr %s12, 8
          %s171 = scalar_lea.vmem %s1, %s170
          // Predicated region
          $region67: #{_zrelu_complex.1} parent=65 // pred_check
            _
          $region68: #{_zrelu_complex.1} parent=65 // pred_check_branch
            %173 = sbr.rel (0) target = $region70
          $region69: #{_zrelu_complex.1} parent=65 // pred_region
            // Predicated region
            $region71: #{_zrelu_complex.1} parent=69 // pred_check
              _
            $region72: #{_zrelu_complex.1} parent=69 // pred_check_branch
              %175 = sbr.rel (0) target = $region74
            $region73: #{_zrelu_complex.1} parent=69 // pred_region
              // Predicated region
              $region86: #{_zrelu_complex.1} parent=73 // pred_check
                _
              $region87: #{_zrelu_complex.1} parent=73 // pred_check_branch
                %193 = sbr.rel (0) target = $region89
              $region88: #{_zrelu_complex.1} parent=73 // pred_region
                loop: start=0, step=1, limit=1
                $region90: #{_zrelu_complex.1} parent=88 // loop_pre_header
                  _
                $region91: #{_zrelu_complex.1} parent=88 // loop_header
                  %s195 = sphi 0, %s199
                  %p196 = scmp.ge.s32.totalorder %s195, 1
                  %s200 = sphi %s166, %s166
                  %s201 = sphi %s171, %s171
                $region92: #{_zrelu_complex.1} parent=88 // loop_header_branch
                  %198 = sbr.rel (%p196) target = $region96
                $region93: #{_zrelu_complex.1} parent=88 // loop_body
                  %v202 = vld [vmem:[%s200] sm:$0xff]
                  %203 = vst [vmem:[%s201] sm:$0xff] %v202
                  %v204 = vld [vmem:[%s200 + $0x8] sm:$0xff]
                  %205 = vst [vmem:[%s201 + $0x10] sm:$0xff] %v204
                $region94: #{_zrelu_complex.1} parent=88 // loop_footer
                  %s199 = sadd.s32 1, %s195
                $region95: #{_zrelu_complex.1} parent=88 // loop_footer_branch
                  %194 = sbr.rel target = $region91
                $region96: #{_zrelu_complex.1} parent=88 // loop_exit
                  _
              $region89: #{_zrelu_complex.1} parent=73 // pred_fallthru
                _
              // Predicated region
              $region97: #{_zrelu_complex.1} parent=73 // pred_check
                _
              $region98: #{_zrelu_complex.1} parent=73 // pred_check_branch
                %207 = sbr.rel target = $region100
              $region99: #{_zrelu_complex.1} parent=73 // pred_region
                _
              $region100: #{_zrelu_complex.1} parent=73 // pred_fallthru
                _
            $region74: #{_zrelu_complex.1} parent=69 // pred_fallthru
              _
            // Predicated region
            $region75: #{_zrelu_complex.1} parent=69 // pred_check
              _
            $region76: #{_zrelu_complex.1} parent=69 // pred_check_branch
              %177 = sbr.rel target = $region78
            $region77: #{_zrelu_complex.1} parent=69 // pred_region
              %s179 = ssub.s32 256, 1
              loop: start=0, step=1, limit=1
              $region79: #{_zrelu_complex.1} parent=77 // loop_pre_header
                _
              $region80: #{_zrelu_complex.1} parent=77 // loop_header
                %s181 = sphi 0, %s185
                %p182 = scmp.ge.s32.totalorder %s181, 1
                %s186 = sphi %s166, %s166
                %s187 = sphi %s171, %s171
              $region81: #{_zrelu_complex.1} parent=77 // loop_header_branch
                %184 = sbr.rel (%p182) target = $region85
              $region82: #{_zrelu_complex.1} parent=77 // loop_body
                %v188 = vld [vmem:[%s186] sm:%s179]
                %189 = vst [vmem:[%s187] sm:%s179] %v188
                %v190 = vld [vmem:[%s186 + $0x8] sm:%s179]
                %191 = vst [vmem:[%s187 + $0x10] sm:%s179] %v190
              $region83: #{_zrelu_complex.1} parent=77 // loop_footer
                %s185 = sadd.s32 1, %s181
              $region84: #{_zrelu_complex.1} parent=77 // loop_footer_branch
                %180 = sbr.rel target = $region80
              $region85: #{_zrelu_complex.1} parent=77 // loop_exit
                _
            $region78: #{_zrelu_complex.1} parent=69 // pred_fallthru
              _
          $region70: #{_zrelu_complex.1} parent=65 // pred_fallthru
            _
          %208 = vnop
        $region66: #{_zrelu_complex.1} parent=57 // pred_fallthru
          _
      $region58: #{_zrelu_complex.1} parent=5 // pred_fallthru
        _
      %p209 = scmp.le.s32.totalorder 2, %s7
      // Predicated region
      $region101: #{_zrelu_complex.1} parent=5 // pred_check
        %p210 = pneg %p209
      $region102: #{_zrelu_complex.1} parent=5 // pred_check_branch
        %212 = sbr.rel (%p210) target = $region104
      $region103: #{_zrelu_complex.1} parent=5 // pred_region
        %s213 = ssub.s32 %s7, 2
        // Predicated region
        $region105: #{_zrelu_complex.1} parent=103 // pred_check
          %p214 = pneg %p62
        $region106: #{_zrelu_complex.1} parent=103 // pred_check_branch
          %216 = sbr.rel (%p214) target = $region108
        $region107: #{_zrelu_complex.1} parent=103 // pred_region
          %s217 = sand.u32 %s47, 1
          %s218 = sand.u32 %s47, 1
          %s219 = smul.addr %s218, 16
          %s220 = scalar_lea.vmem [#allocation3], %s219
        $region108: #{_zrelu_complex.1} parent=103 // pred_fallthru
          _
      $region104: #{_zrelu_complex.1} parent=5 // pred_fallthru
        _
    $region6: #{_zrelu_complex.1} parent=1 // loop_footer
      %s11 = sadd.s32 1, %s7
    $region7: #{_zrelu_complex.1} parent=1 // loop_footer_branch
      %6 = sbr.rel target = $region3
    $region8: #{_zrelu_complex.1} parent=1 // loop_exit
      _

</llo_original>
